<compile_context>
chip_gen: v7x
topology: tpu7x:2x2x1
jax: 0.10.0
libtpu: 0.0.40
codegen_flags: <defaults>
</compile_context>

<pallas_src>
import functools

import jax
import jax.numpy as jnp
from jax.experimental import pallas as pl
from jax.experimental.pallas import tpu as pltpu

BN_EPS = 1e-5


# ----------------------------------------------------------------------------
# Pointwise (1x1) conv + folded BN on a lane-dense (Cin, M) slab
# ----------------------------------------------------------------------------
def _pw(x, w, b, relu6):
    """x: (Cin, M); w: (Cout, Cin) with BN scale folded; b: (Cout, 1).

    Small Cin -> unrolled VPU broadcast-FMA (an MXU pass at K=4/8 would be
    mostly wasted).  Large Cin -> MXU matmul, which issues on the vector-
    extended slot and leaves the VALU free for rolls/selects/ReLU6.
    """
    cout, cin = w.shape
    if cin > 16:
        acc = jnp.dot(w, x, preferred_element_type=jnp.float32) + b
    else:
        acc = w[:, 0:1] * x[0:1, :]
        for ci in range(1, cin):
            acc = acc + w[:, ci:ci + 1] * x[ci:ci + 1, :]
        acc = acc + b
    return jnp.clip(acc, 0.0, 6.0) if relu6 else acc


# ----------------------------------------------------------------------------
# Fused Pallas kernel: one block holds `nb` images stacked on the sublane axis
# ----------------------------------------------------------------------------
def _fused_kernel(x_ref, dw_ref, pw_ref, o_ref, *, H, W, c_in, c_out, hidden,
                  nb, expand):
    HW = H * W
    x = x_ref[...]                                   # (nb*c_in, HW), f32

    # --- boundary masks, built once per grid step ----------------------------
    lane = jax.lax.broadcasted_iota(jnp.int32, (1, HW), 1)
    is_top = lane < W                                # spatial row 0
    is_bot = lane >= (HW - W)                        # spatial row H-1
    if W & (W - 1) == 0:                             # power-of-two W: AND, no div/mod
        col = lane & (W - 1)
    else:
        col = lane % W
    is_left = col == 0
    is_right = col == W - 1

    # --- unpack the two packed parameter operands (tiny static slices) -------
    dwp = dw_ref[...]                                # (nb*hidden, 8), image-tiled
    k1, bd1 = dwp[:, 0:3], dwp[:, 3:4]
    k2, bd2 = dwp[:, 4:7], dwp[:, 7:8]
    pwp = pw_ref[...]
    if expand:
        w1 = pwp[0:hidden, 0:c_in]
        b1 = pwp[0:hidden, c_in:c_in + 1]
        w2 = pwp[hidden:hidden + c_out, 0:hidden]
        b2 = pwp[hidden:hidden + c_out, hidden:hidden + 1]
    else:
        w2 = pwp[:, 0:c_in]
        b2 = pwp[:, c_in:c_in + 1]

    # --- optional pointwise expansion (ReLU6) --------------------------------
    # Channel mixing is per image, so loop over the nb images of this block
    # and restack the results on the sublane axis.
    if expand:
        a = jnp.concatenate(
            [_pw(x[n * c_in:(n + 1) * c_in, :], w1, b1, relu6=True)
             for n in range(nb)], axis=0)            # (nb*hidden, HW)
    else:
        a = x                                        # hidden == c_in

    # --- depthwise (3,1), stride 1, padding (1,1), ReLU6 ---------------------
    # Taps over H are lane rolls by +/-W; images sit on sublanes, so rolls can
    # never mix images.  Zero H-padding enforced with the row masks.
    up = jnp.where(is_top, 0.0, jnp.roll(a, W, axis=1))          # a[h-1, w]
    down = jnp.where(is_bot, 0.0, jnp.roll(a, -W, axis=1))       # a[h+1, w]
    a = k1[:, 0:1] * up + k1[:, 1:2] * a + k1[:, 2:3] * down + bd1
    a = jnp.clip(a, 0.0, 6.0)

    # --- depthwise (1,3), stride 1, padding 0, ReLU6 -------------------------
    # This layer consumes the two extra W-padding columns produced by the
    # previous layer; those columns hold the per-channel constant
    # relu6(bn_bias) because every H-tap there saw zero-padded input.
    edge = jnp.clip(bd1, 0.0, 6.0)
    left = jnp.where(is_left, edge, jnp.roll(a, 1, axis=1))      # a[h, w-1]
    right = jnp.where(is_right, edge, jnp.roll(a, -1, axis=1))   # a[h, w+1]
    a = k2[:, 0:1] * left + k2[:, 1:2] * a + k2[:, 2:3] * right + bd2
    a = jnp.clip(a, 0.0, 6.0)

    # --- pointwise projection (Linear) + residual, single full-block store ---
    y = jnp.concatenate(
        [_pw(a[n * hidden:(n + 1) * hidden, :], w2, b2, relu6=False)
         for n in range(nb)], axis=0)                # (nb*c_out, HW)
    o_ref[...] = x + y                               # use_connect residual add


# ----------------------------------------------------------------------------
# Wrapper: one pallas_call for the whole block
# ----------------------------------------------------------------------------
def _pick_batch_blocks(n, *channel_counts):
    """2 parallel grid steps (feeds both v7x TensorCores) when each half-batch
    block keeps (8,128) sublane alignment; otherwise 1 step (pure latency win
    on single-TC v5e/v6e and for toy shapes like N=2, C=4)."""
    if n % 2 == 0 and all(((n // 2) * c) % 8 == 0 for c in channel_counts):
        return 2
    return 1


def _pad_cols(a, width):
    pad = width - a.shape[1]
    if pad == 0:
        return a
    return jnp.concatenate([a, jnp.zeros((a.shape[0], pad), a.dtype)], axis=1)


def inverted_residual_as6(x_nchw, params, expansion_factor, batch_blocks=None):
    N, C, H, W = x_nchw.shape
    HW = H * W
    expand = expansion_factor != 1
    hidden = C * expansion_factor
    c_out = C

    if batch_blocks is None:
        batch_blocks = _pick_batch_blocks(N, C, hidden)
    assert N % batch_blocks == 0
    nb = N // batch_blocks                            # images per grid step

    # NCHW -> (N*C, HW): pure reshape, channels+images on sublanes, HW on lanes.
    x = x_nchw.reshape(N * C, HW).astype(jnp.float32)

    # ---- pack parameters into two small operands (trace-time, tiny) ---------
    k1, bd1 = params["dw31"]
    k2, bd2 = params["dw13"]
    dw_pack = jnp.tile(jnp.concatenate([k1, bd1, k2, bd2], axis=1), (nb, 1))

    w2, b2 = params["pw2"]
    if expand:
        w1, b1 = params["pw1"]
        width = max(C, hidden) + 1
        pw_pack = jnp.concatenate(
            [_pad_cols(jnp.concatenate([w1, b1], axis=1), width),
             _pad_cols(jnp.concatenate([w2, b2], axis=1), width)], axis=0)
    else:
        pw_pack = jnp.concatenate([w2, b2], axis=1)

    kernel = functools.partial(_fused_kernel, H=H, W=W, c_in=C, c_out=c_out,
                               hidden=hidden, nb=nb, expand=expand)
    out = pl.pallas_call(
        kernel,
        out_shape=jax.ShapeDtypeStruct((N * c_out, HW), jnp.float32),
        grid=(batch_blocks,),
        in_specs=[
            pl.BlockSpec((nb * C, HW), lambda i: (i, 0)),
            pl.BlockSpec(dw_pack.shape, lambda i: (0, 0)),
            pl.BlockSpec(pw_pack.shape, lambda i: (0, 0)),
        ],
        out_specs=pl.BlockSpec((nb * c_out, HW), lambda i: (i, 0)),
        compiler_params=pltpu.CompilerParams(
            dimension_semantics=("parallel",)),
    )(x, dw_pack, pw_pack)
    return out.reshape(N, c_out, H, W)


# ----------------------------------------------------------------------------
# Deterministic parameter construction (ConvBlock = Conv2d(bias=False) + BN)
# BN scale is folded into the conv weights; only bias is carried.
# ----------------------------------------------------------------------------
def _fold_bn(key, c):
    k1, k2, k3, k4 = jax.random.split(key, 4)
    gamma = jax.random.uniform(k1, (c,), jnp.float32, 0.5, 1.5)
    beta = 0.1 * jax.random.normal(k2, (c,), jnp.float32)
    mean = 0.1 * jax.random.normal(k3, (c,), jnp.float32)
    var = jax.random.uniform(k4, (c,), jnp.float32, 0.5, 1.5)
    scale = gamma / jnp.sqrt(var + BN_EPS)
    bias = beta - mean * scale
    return scale, bias


def init_pw(key, cin, cout):
    kw, kb = jax.random.split(key)
    w = 0.2 * jax.random.normal(kw, (cout, cin), jnp.float32)
    scale, bias = _fold_bn(kb, cout)
    return w * scale[:, None], bias.reshape(cout, 1)


def init_dw(key, c):
    kw, kb = jax.random.split(key)
    k = 0.2 * jax.random.normal(kw, (c, 3), jnp.float32)
    scale, bias = _fold_bn(kb, c)
    return k * scale[:, None], bias.reshape(c, 1)


def init_inverted_residual_as6(key, in_c, out_c, expansion_factor):
    assert in_c == out_c, "use_connect path requires stride=1 and in_c == out_c"
    hidden_c = in_c * expansion_factor
    keys = jax.random.split(key, 4)
    p = {}
    if expansion_factor != 1:
        p["pw1"] = init_pw(keys[0], in_c, hidden_c)
    p["dw31"] = init_dw(keys[1], hidden_c)
    p["dw13"] = init_dw(keys[2], hidden_c)
    p["pw2"] = init_pw(keys[3], hidden_c, out_c)
    return p


# ----------------------------------------------------------------------------
# Pure-JAX reference (same folded parameters) for a runtime correctness check
# ----------------------------------------------------------------------------
def _ref_forward(x, params, expansion_factor):
    N, C, H, W = x.shape

    def pw(t, w, b, relu6):
        y = jnp.einsum("oc,nchw->nohw", w, t) + b.reshape(1, -1, 1, 1)
        return jnp.clip(y, 0.0, 6.0) if relu6 else y

    def dw31(t, k, b):  # kernel (3,1), padding (1,1) -> output (H, W+2)
        tp = jnp.pad(t, ((0, 0), (0, 0), (1, 1), (1, 1)))
        y = sum(k[:, i].reshape(1, -1, 1, 1) * tp[:, :, i:i + H, :]
                for i in range(3))
        return jnp.clip(y + b.reshape(1, -1, 1, 1), 0.0, 6.0)

    def dw13(t, k, b):  # kernel (1,3), padding 0 -> output (H, W)
        Wp = t.shape[3]
        y = sum(k[:, j].reshape(1, -1, 1, 1) * t[:, :, :, j:j + Wp - 2]
                for j in range(3))
        return jnp.clip(y + b.reshape(1, -1, 1, 1), 0.0, 6.0)

    a = x
    if expansion_factor != 1:
        a = pw(a, *params["pw1"], relu6=True)
    a = dw31(a, *params["dw31"])
    a = dw13(a, *params["dw13"])
    a = pw(a, *params["pw2"], relu6=False)
    return x + a


if __name__ == "__main__":
    key = jax.random.PRNGKey(0)
    kx, kp1, kp2 = jax.random.split(key, 3)
    N, C, H, W = 2, 4, 16, 16
    x = jax.random.normal(kx, (N, C, H, W), jnp.float32)

    for ef, kp in ((1, kp1), (2, kp2)):   # both __init__ branches of the module
        params = init_inverted_residual_as6(kp, C, C, expansion_factor=ef)
        fwd = jax.jit(lambda inp, p=params, e=ef: inverted_residual_as6(inp, p, e))
        out = fwd(x)
        jax.block_until_ready(out)
        assert out.shape == (N, C, H, W), out.shape
        assert bool(jnp.all(jnp.isfinite(out)))
        ref = _ref_forward(x, params, ef)
        err = float(jnp.max(jnp.abs(out - ref)))
        assert err < 1e-4, f"max abs err {err} (expansion_factor={ef})"
    print("KERNEL_OK")
</pallas_src>

<mosaic_0001>
module attributes {stable_mosaic.version = 11 : i64} {
  func.func @_fused_kernel(%arg0: i32, %arg1: memref<8x256xf32, #tpu.memory_space<vmem>>, %arg2: memref<8x8xf32, #tpu.memory_space<vmem>>, %arg3: memref<4x5xf32, #tpu.memory_space<vmem>>, %arg4: memref<8x256xf32, #tpu.memory_space<vmem>>) attributes {dimension_semantics = [#tpu.dimension_semantics<parallel>], iteration_bounds = array<i64: 1>, scalar_prefetch = 0 : i64, scratch_operands = 0 : i64, tpu.core_type = #tpu.core_type<tc>, window_params = [{transform_indices = @transform_0, window_bounds = array<i64: 8, 256>}, {pipeline_mode = #tpu.pipeline_mode<synchronous>, transform_indices = @transform_1, window_bounds = array<i64: 8, 8>}, {pipeline_mode = #tpu.pipeline_mode<synchronous>, transform_indices = @transform_2, window_bounds = array<i64: 4, 5>}, {transform_indices = @transform_3, window_bounds = array<i64: 8, 256>}]} {
    %c0 = arith.constant 0 : index
    %c0_0 = arith.constant 0 : index
    %0 = vector.load %arg1[%c0, %c0_0] : memref<8x256xf32, #tpu.memory_space<vmem>>, vector<8x256xf32>
    %1 = tpu.iota {dimensions = array<i32: 1>} : vector<1x256xi32>
    %c16_i32 = arith.constant 16 : i32
    %2 = vector.broadcast %c16_i32 : i32 to vector<1x256xi32>
    %3 = arith.cmpi slt, %1, %2 : vector<1x256xi32>
    %c240_i32 = arith.constant 240 : i32
    %4 = vector.broadcast %c240_i32 : i32 to vector<1x256xi32>
    %5 = arith.cmpi sge, %1, %4 : vector<1x256xi32>
    %c15_i32 = arith.constant 15 : i32
    %6 = vector.broadcast %c15_i32 : i32 to vector<1x256xi32>
    %7 = arith.andi %1, %6 : vector<1x256xi32>
    %c0_i32 = arith.constant 0 : i32
    %8 = vector.broadcast %c0_i32 : i32 to vector<1x256xi32>
    %9 = arith.cmpi eq, %7, %8 : vector<1x256xi32>
    %c15_i32_1 = arith.constant 15 : i32
    %10 = vector.broadcast %c15_i32_1 : i32 to vector<1x256xi32>
    %11 = arith.cmpi eq, %7, %10 : vector<1x256xi32>
    %c0_2 = arith.constant 0 : index
    %c0_3 = arith.constant 0 : index
    %12 = vector.load %arg2[%c0_2, %c0_3] : memref<8x8xf32, #tpu.memory_space<vmem>>, vector<8x8xf32>
    %13 = vector.extract_strided_slice %12 {offsets = [0, 0], sizes = [8, 3], strides = [1, 1]} : vector<8x8xf32> to vector<8x3xf32>
    %14 = vector.extract_strided_slice %12 {offsets = [0, 3], sizes = [8, 1], strides = [1, 1]} : vector<8x8xf32> to vector<8x1xf32>
    %15 = vector.extract_strided_slice %12 {offsets = [0, 4], sizes = [8, 3], strides = [1, 1]} : vector<8x8xf32> to vector<8x3xf32>
    %16 = vector.extract_strided_slice %12 {offsets = [0, 7], sizes = [8, 1], strides = [1, 1]} : vector<8x8xf32> to vector<8x1xf32>
    %c0_4 = arith.constant 0 : index
    %c0_5 = arith.constant 0 : index
    %17 = vector.load %arg3[%c0_4, %c0_5] : memref<4x5xf32, #tpu.memory_space<vmem>>, vector<4x5xf32>
    %18 = vector.extract_strided_slice %17 {offsets = [0, 0], sizes = [4, 4], strides = [1, 1]} : vector<4x5xf32> to vector<4x4xf32>
    %19 = vector.extract_strided_slice %17 {offsets = [0, 4], sizes = [4, 1], strides = [1, 1]} : vector<4x5xf32> to vector<4x1xf32>
    %20 = vector.extract_strided_slice %0 {offsets = [0, 240], sizes = [8, 16], strides = [1, 1]} : vector<8x256xf32> to vector<8x16xf32>
    %21 = vector.extract_strided_slice %0 {offsets = [0, 0], sizes = [8, 240], strides = [1, 1]} : vector<8x256xf32> to vector<8x240xf32>
    %22 = tpu.concatenate %20, %21 in 1 : vector<8x16xf32>, vector<8x240xf32> -> vector<8x256xf32>
    %cst = arith.constant 0.000000e+00 : f32
    %23 = vector.shape_cast %3 : vector<1x256xi1> to vector<1x256xi1>
    %24 = vector.broadcast %23 : vector<1x256xi1> to vector<8x256xi1>
    %25 = vector.broadcast %cst : f32 to vector<8x256xf32>
    %26 = arith.select %24, %25, %22 : vector<8x256xi1>, vector<8x256xf32>
    %27 = vector.extract_strided_slice %0 {offsets = [0, 16], sizes = [8, 240], strides = [1, 1]} : vector<8x256xf32> to vector<8x240xf32>
    %28 = vector.extract_strided_slice %0 {offsets = [0, 0], sizes = [8, 16], strides = [1, 1]} : vector<8x256xf32> to vector<8x16xf32>
    %29 = tpu.concatenate %27, %28 in 1 : vector<8x240xf32>, vector<8x16xf32> -> vector<8x256xf32>
    %cst_6 = arith.constant 0.000000e+00 : f32
    %30 = vector.shape_cast %5 : vector<1x256xi1> to vector<1x256xi1>
    %31 = vector.broadcast %30 : vector<1x256xi1> to vector<8x256xi1>
    %32 = vector.broadcast %cst_6 : f32 to vector<8x256xf32>
    %33 = arith.select %31, %32, %29 : vector<8x256xi1>, vector<8x256xf32>
    %34 = vector.extract_strided_slice %13 {offsets = [0, 0], sizes = [8, 1], strides = [1, 1]} : vector<8x3xf32> to vector<8x1xf32>
    %35 = vector.broadcast %34 : vector<8x1xf32> to vector<8x256xf32>
    %36 = arith.mulf %35, %26 : vector<8x256xf32>
    %37 = vector.extract_strided_slice %13 {offsets = [0, 1], sizes = [8, 1], strides = [1, 1]} : vector<8x3xf32> to vector<8x1xf32>
    %38 = vector.broadcast %37 : vector<8x1xf32> to vector<8x256xf32>
    %39 = arith.mulf %38, %0 : vector<8x256xf32>
    %40 = arith.addf %36, %39 : vector<8x256xf32>
    %41 = vector.extract_strided_slice %13 {offsets = [0, 2], sizes = [8, 1], strides = [1, 1]} : vector<8x3xf32> to vector<8x1xf32>
    %42 = vector.broadcast %41 : vector<8x1xf32> to vector<8x256xf32>
    %43 = arith.mulf %42, %33 : vector<8x256xf32>
    %44 = arith.addf %40, %43 : vector<8x256xf32>
    %45 = vector.broadcast %14 : vector<8x1xf32> to vector<8x256xf32>
    %46 = arith.addf %44, %45 : vector<8x256xf32>
    %cst_7 = arith.constant 0.000000e+00 : f32
    %cst_8 = arith.constant 6.000000e+00 : f32
    %47 = vector.broadcast %cst_7 : f32 to vector<8x256xf32>
    %48 = arith.maximumf %47, %46 : vector<8x256xf32>
    %49 = vector.broadcast %cst_8 : f32 to vector<8x256xf32>
    %50 = arith.minimumf %49, %48 : vector<8x256xf32>
    %cst_9 = arith.constant 0.000000e+00 : f32
    %cst_10 = arith.constant 6.000000e+00 : f32
    %51 = vector.broadcast %cst_9 : f32 to vector<8x1xf32>
    %52 = arith.maximumf %51, %14 : vector<8x1xf32>
    %53 = vector.broadcast %cst_10 : f32 to vector<8x1xf32>
    %54 = arith.minimumf %53, %52 : vector<8x1xf32>
    %55 = vector.extract_strided_slice %50 {offsets = [0, 255], sizes = [8, 1], strides = [1, 1]} : vector<8x256xf32> to vector<8x1xf32>
    %56 = vector.extract_strided_slice %50 {offsets = [0, 0], sizes = [8, 255], strides = [1, 1]} : vector<8x256xf32> to vector<8x255xf32>
    %57 = tpu.concatenate %55, %56 in 1 : vector<8x1xf32>, vector<8x255xf32> -> vector<8x256xf32>
    %58 = vector.shape_cast %9 : vector<1x256xi1> to vector<1x256xi1>
    %59 = vector.broadcast %58 : vector<1x256xi1> to vector<8x256xi1>
    %60 = vector.shape_cast %54 : vector<8x1xf32> to vector<8x1xf32>
    %61 = vector.broadcast %60 : vector<8x1xf32> to vector<8x256xf32>
    %62 = arith.select %59, %61, %57 : vector<8x256xi1>, vector<8x256xf32>
    %63 = vector.extract_strided_slice %50 {offsets = [0, 1], sizes = [8, 255], strides = [1, 1]} : vector<8x256xf32> to vector<8x255xf32>
    %64 = vector.extract_strided_slice %50 {offsets = [0, 0], sizes = [8, 1], strides = [1, 1]} : vector<8x256xf32> to vector<8x1xf32>
    %65 = tpu.concatenate %63, %64 in 1 : vector<8x255xf32>, vector<8x1xf32> -> vector<8x256xf32>
    %66 = vector.shape_cast %11 : vector<1x256xi1> to vector<1x256xi1>
    %67 = vector.broadcast %66 : vector<1x256xi1> to vector<8x256xi1>
    %68 = vector.shape_cast %54 : vector<8x1xf32> to vector<8x1xf32>
    %69 = vector.broadcast %68 : vector<8x1xf32> to vector<8x256xf32>
    %70 = arith.select %67, %69, %65 : vector<8x256xi1>, vector<8x256xf32>
    %71 = vector.extract_strided_slice %15 {offsets = [0, 0], sizes = [8, 1], strides = [1, 1]} : vector<8x3xf32> to vector<8x1xf32>
    %72 = vector.broadcast %71 : vector<8x1xf32> to vector<8x256xf32>
    %73 = arith.mulf %72, %62 : vector<8x256xf32>
    %74 = vector.extract_strided_slice %15 {offsets = [0, 1], sizes = [8, 1], strides = [1, 1]} : vector<8x3xf32> to vector<8x1xf32>
    %75 = vector.broadcast %74 : vector<8x1xf32> to vector<8x256xf32>
    %76 = arith.mulf %75, %50 : vector<8x256xf32>
    %77 = arith.addf %73, %76 : vector<8x256xf32>
    %78 = vector.extract_strided_slice %15 {offsets = [0, 2], sizes = [8, 1], strides = [1, 1]} : vector<8x3xf32> to vector<8x1xf32>
    %79 = vector.broadcast %78 : vector<8x1xf32> to vector<8x256xf32>
    %80 = arith.mulf %79, %70 : vector<8x256xf32>
    %81 = arith.addf %77, %80 : vector<8x256xf32>
    %82 = vector.broadcast %16 : vector<8x1xf32> to vector<8x256xf32>
    %83 = arith.addf %81, %82 : vector<8x256xf32>
    %cst_11 = arith.constant 0.000000e+00 : f32
    %cst_12 = arith.constant 6.000000e+00 : f32
    %84 = vector.broadcast %cst_11 : f32 to vector<8x256xf32>
    %85 = arith.maximumf %84, %83 : vector<8x256xf32>
    %86 = vector.broadcast %cst_12 : f32 to vector<8x256xf32>
    %87 = arith.minimumf %86, %85 : vector<8x256xf32>
    %88 = vector.extract_strided_slice %87 {offsets = [0, 0], sizes = [4, 256], strides = [1, 1]} : vector<8x256xf32> to vector<4x256xf32>
    %89 = vector.extract_strided_slice %18 {offsets = [0, 0], sizes = [4, 1], strides = [1, 1]} : vector<4x4xf32> to vector<4x1xf32>
    %90 = vector.extract_strided_slice %88 {offsets = [0, 0], sizes = [1, 256], strides = [1, 1]} : vector<4x256xf32> to vector<1x256xf32>
    %91 = vector.broadcast %89 : vector<4x1xf32> to vector<4x256xf32>
    %92 = vector.broadcast %90 : vector<1x256xf32> to vector<4x256xf32>
    %93 = arith.mulf %91, %92 : vector<4x256xf32>
    %94 = vector.extract_strided_slice %18 {offsets = [0, 1], sizes = [4, 1], strides = [1, 1]} : vector<4x4xf32> to vector<4x1xf32>
    %95 = vector.extract_strided_slice %88 {offsets = [1, 0], sizes = [1, 256], strides = [1, 1]} : vector<4x256xf32> to vector<1x256xf32>
    %96 = vector.broadcast %94 : vector<4x1xf32> to vector<4x256xf32>
    %97 = vector.broadcast %95 : vector<1x256xf32> to vector<4x256xf32>
    %98 = arith.mulf %96, %97 : vector<4x256xf32>
    %99 = arith.addf %93, %98 : vector<4x256xf32>
    %100 = vector.extract_strided_slice %18 {offsets = [0, 2], sizes = [4, 1], strides = [1, 1]} : vector<4x4xf32> to vector<4x1xf32>
    %101 = vector.extract_strided_slice %88 {offsets = [2, 0], sizes = [1, 256], strides = [1, 1]} : vector<4x256xf32> to vector<1x256xf32>
    %102 = vector.broadcast %100 : vector<4x1xf32> to vector<4x256xf32>
    %103 = vector.broadcast %101 : vector<1x256xf32> to vector<4x256xf32>
    %104 = arith.mulf %102, %103 : vector<4x256xf32>
    %105 = arith.addf %99, %104 : vector<4x256xf32>
    %106 = vector.extract_strided_slice %18 {offsets = [0, 3], sizes = [4, 1], strides = [1, 1]} : vector<4x4xf32> to vector<4x1xf32>
    %107 = vector.extract_strided_slice %88 {offsets = [3, 0], sizes = [1, 256], strides = [1, 1]} : vector<4x256xf32> to vector<1x256xf32>
    %108 = vector.broadcast %106 : vector<4x1xf32> to vector<4x256xf32>
    %109 = vector.broadcast %107 : vector<1x256xf32> to vector<4x256xf32>
    %110 = arith.mulf %108, %109 : vector<4x256xf32>
    %111 = arith.addf %105, %110 : vector<4x256xf32>
    %112 = vector.broadcast %19 : vector<4x1xf32> to vector<4x256xf32>
    %113 = arith.addf %111, %112 : vector<4x256xf32>
    %114 = vector.extract_strided_slice %87 {offsets = [4, 0], sizes = [4, 256], strides = [1, 1]} : vector<8x256xf32> to vector<4x256xf32>
    %115 = vector.extract_strided_slice %18 {offsets = [0, 0], sizes = [4, 1], strides = [1, 1]} : vector<4x4xf32> to vector<4x1xf32>
    %116 = vector.extract_strided_slice %114 {offsets = [0, 0], sizes = [1, 256], strides = [1, 1]} : vector<4x256xf32> to vector<1x256xf32>
    %117 = vector.broadcast %115 : vector<4x1xf32> to vector<4x256xf32>
    %118 = vector.broadcast %116 : vector<1x256xf32> to vector<4x256xf32>
    %119 = arith.mulf %117, %118 : vector<4x256xf32>
    %120 = vector.extract_strided_slice %18 {offsets = [0, 1], sizes = [4, 1], strides = [1, 1]} : vector<4x4xf32> to vector<4x1xf32>
    %121 = vector.extract_strided_slice %114 {offsets = [1, 0], sizes = [1, 256], strides = [1, 1]} : vector<4x256xf32> to vector<1x256xf32>
    %122 = vector.broadcast %120 : vector<4x1xf32> to vector<4x256xf32>
    %123 = vector.broadcast %121 : vector<1x256xf32> to vector<4x256xf32>
    %124 = arith.mulf %122, %123 : vector<4x256xf32>
    %125 = arith.addf %119, %124 : vector<4x256xf32>
    %126 = vector.extract_strided_slice %18 {offsets = [0, 2], sizes = [4, 1], strides = [1, 1]} : vector<4x4xf32> to vector<4x1xf32>
    %127 = vector.extract_strided_slice %114 {offsets = [2, 0], sizes = [1, 256], strides = [1, 1]} : vector<4x256xf32> to vector<1x256xf32>
    %128 = vector.broadcast %126 : vector<4x1xf32> to vector<4x256xf32>
    %129 = vector.broadcast %127 : vector<1x256xf32> to vector<4x256xf32>
    %130 = arith.mulf %128, %129 : vector<4x256xf32>
    %131 = arith.addf %125, %130 : vector<4x256xf32>
    %132 = vector.extract_strided_slice %18 {offsets = [0, 3], sizes = [4, 1], strides = [1, 1]} : vector<4x4xf32> to vector<4x1xf32>
    %133 = vector.extract_strided_slice %114 {offsets = [3, 0], sizes = [1, 256], strides = [1, 1]} : vector<4x256xf32> to vector<1x256xf32>
    %134 = vector.broadcast %132 : vector<4x1xf32> to vector<4x256xf32>
    %135 = vector.broadcast %133 : vector<1x256xf32> to vector<4x256xf32>
    %136 = arith.mulf %134, %135 : vector<4x256xf32>
    %137 = arith.addf %131, %136 : vector<4x256xf32>
    %138 = vector.broadcast %19 : vector<4x1xf32> to vector<4x256xf32>
    %139 = arith.addf %137, %138 : vector<4x256xf32>
    %140 = tpu.concatenate %113, %139 in 0 : vector<4x256xf32>, vector<4x256xf32> -> vector<8x256xf32>
    %141 = arith.addf %0, %140 : vector<8x256xf32>
    %c0_13 = arith.constant 0 : index
    %c0_14 = arith.constant 0 : index
    %142 = vector.load %arg4[%c0_13, %c0_14] : memref<8x256xf32, #tpu.memory_space<vmem>>, vector<8x256xf32>
    tpu.vector_store %arg4[%c0_13, %c0_14], %141 {strides = array<i32>} : memref<8x256xf32, #tpu.memory_space<vmem>>, vector<8x256xf32>,
    return
  }
  func.func @transform_0(%arg0: i32) -> (i32, i32) {
    %c0_i32 = arith.constant 0 : i32
    %c0_i32_0 = arith.constant 0 : i32
    return %arg0, %c0_i32 : i32, i32
  }
  func.func @transform_1(%arg0: i32) -> (i32, i32) {
    %c0_i32 = arith.constant 0 : i32
    %c0_i32_0 = arith.constant 0 : i32
    %c0_i32_1 = arith.constant 0 : i32
    return %c0_i32, %c0_i32_0 : i32, i32
  }
  func.func @transform_2(%arg0: i32) -> (i32, i32) {
    %c0_i32 = arith.constant 0 : i32
    %c0_i32_0 = arith.constant 0 : i32
    %c0_i32_1 = arith.constant 0 : i32
    return %c0_i32, %c0_i32_0 : i32, i32
  }
  func.func @transform_3(%arg0: i32) -> (i32, i32) {
    %c0_i32 = arith.constant 0 : i32
    %c0_i32_0 = arith.constant 0 : i32
    return %arg0, %c0_i32 : i32, i32
  }
}

</mosaic_0001>

<llo_original>
// kernel: _lambda_.1
$region0: #{_lambda_.1}
  #allocation0 [shape = 'u32[]', space=smem, size = 0x4, offset = 0x4, fixed_abs, tag = 'smem constant byte address 0x4 - core index']
  #allocation1 [shape = 'u32[144,128]{1,0:T(1,128)}', space=vmem, size = 0x12000, scoped, tag = 'internal scratch']
  %s0 = inlined_call_operand.vmem [shape: f32[8,256], index: 0, kind: input, shape index: {}]
  %s1 = inlined_call_operand.vmem [shape: f32[8,8], index: 1, kind: input, shape index: {}]
  %s2 = inlined_call_operand.vmem [shape: f32[4,5], index: 2, kind: input, shape index: {}]
  %s3 = inlined_call_operand.vmem [shape: f32[8,256], index: 3, kind: output, shape index: {}]
  %s4 = sld [smem:[#allocation0]]
  $region22: #{_lambda_.1} parent=0
    _
  %s6 = ssub.s32 1, %s4
  %s7 = scalar_select 0, %s6, %s4
  // Predicated region
  $region2: #{_lambda_.1} parent=0 // pred_check
    _
  $region3: #{_lambda_.1} parent=0 // pred_check_branch
    %9 = sbr.rel (0) target = $region5
  $region4: #{_lambda_.1} parent=0 // pred_region
    _
  $region5: #{_lambda_.1} parent=0 // pred_fallthru
    _
  // Predicated region
  $region6: #{_lambda_.1} parent=0 // pred_check
    _
  $region7: #{_lambda_.1} parent=0 // pred_check_branch
    %11 = sbr.rel (0) target = $region9
  $region8: #{_lambda_.1} parent=0 // pred_region
    _
  $region9: #{_lambda_.1} parent=0 // pred_fallthru
    _
  // Predicated region
  $region10: #{_lambda_.1} parent=0 // pred_check
    _
  $region11: #{_lambda_.1} parent=0 // pred_check_branch
    %13 = sbr.rel (0) target = $region13
  $region12: #{_lambda_.1} parent=0 // pred_region
    _
  $region13: #{_lambda_.1} parent=0 // pred_fallthru
    _
  %v14 = vld [vmem:[%s0] sm:$0xff]
  %v15 = vld [vmem:[%s0 + $0x8] sm:$0xff]
  %v16 = vlaneseq
  %v17 = vand.u32 %v16, 127
  %v18 = vadd.s32 %v17, 128
  %vm19 = vcmp.lt.s32.totalorder %v17, 16
  %vm20 = vcmp.lt.s32.totalorder %v18, 16
  %vm21 = vcmp.ge.s32.totalorder %v17, 240
  %vm22 = vcmp.ge.s32.totalorder %v18, 240
  %v23 = vand.u32 %v17, 15
  %v24 = vand.u32 %v18, 15
  %vm25 = vcmp.eq.s32.totalorder %v23, 0
  %vm26 = vcmp.eq.s32.totalorder %v24, 0
  %vm27 = vcmp.eq.s32.totalorder %v23, 15
  %vm28 = vcmp.eq.s32.totalorder %v24, 15
  %v29 = vld [vmem:[%s1] sm:$0xff]
  %v30 = vld [vmem:[%s2] sm:$0xf]
  %32 = vrot.lane.b32.xlu0 %v15, 16
  %v33 = vpop.permute.xlu0 %32
  %36 = vrot.lane.b32.xlu0 %v14, 16
  %v37 = vpop.permute.xlu0 %36
  %vm38 = vcmask 130048
  %v39 = vsel %vm38, %v37, %v33
  %v42 = vsel %vm38, %v33, %v37
  %v43 = vsel %vm19, 1, 0
  %v44 = vsel %vm20, 1, 0
  %vm45 = vcmp.eq.s32.totalorder %v43, 1
  %vm46 = vcmp.eq.s32.totalorder %v44, 1
  %v47 = vsel %vm45, 0.0, %v42
  %v48 = vsel %vm46, 0.0, %v39
  %49 = vrot.lane.b32.xlu0 %v14, 112
  %v50 = vpop.permute.xlu0 %49
  %51 = vrot.lane.b32.xlu0 %v15, 112
  %v52 = vpop.permute.xlu0 %51
  %vm53 = vcmask 916480
  %v54 = vsel %vm53, %v50, %v52
  %v58 = vsel %vm53, %v52, %v50
  %v59 = vsel %vm21, 1, 0
  %v60 = vsel %vm22, 1, 0
  %vm61 = vcmp.eq.s32.totalorder %v59, 1
  %vm62 = vcmp.eq.s32.totalorder %v60, 1
  %v63 = vsel %vm61, 0.0, %v54
  %v64 = vsel %vm62, 0.0, %v58
  %66 = vset.pattern.permute.xlu0 0
  %67 = vperm.xlu0 %66, %v29
  %v68 = vpop.permute.xlu0 %67
  %v70 = vmul.f32 %v68, %v47
  %v71 = vmul.f32 %v68, %v48
  %72 = vset.pattern.permute.xlu0 1
  %73 = vperm.xlu0 %72, %v29
  %v74 = vpop.permute.xlu0 %73
  %v76 = vmul.f32 %v74, %v14
  %v77 = vmul.f32 %v74, %v15
  %v78 = vadd.f32 %v70, %v76
  %v79 = vadd.f32 %v71, %v77
  %80 = vset.pattern.permute.xlu0 2
  %81 = vperm.xlu0 %80, %v29
  %v82 = vpop.permute.xlu0 %81
  %v84 = vmul.f32 %v82, %v63
  %v85 = vmul.f32 %v82, %v64
  %v86 = vadd.f32 %v78, %v84
  %v87 = vadd.f32 %v79, %v85
  %88 = vset.pattern.permute.xlu0 3
  %89 = vperm.xlu0 %88, %v29
  %v90 = vpop.permute.xlu0 %89
  %v92 = vadd.f32 %v86, %v90
  %v93 = vadd.f32 %v87, %v90
  %v94 = vmax.f32 %v92, 0.0
  %v95 = vmax.f32 %v93, 0.0
  %v96 = vmin.f32 %v94, 6.0
  %v97 = vmin.f32 %v95, 6.0
  %v98 = vmax.f32 %v29, 0.0
  %v99 = vmin.f32 %v98, 6.0
  %101 = vrot.lane.b32.xlu0 %v97, 1
  %v102 = vpop.permute.xlu0 %101
  %105 = vrot.lane.b32.xlu0 %v96, 1
  %v106 = vpop.permute.xlu0 %105
  %vm107 = vcmask 7168
  %v108 = vsel %vm107, %v106, %v102
  %v111 = vsel %vm107, %v102, %v106
  %v112 = vsel %vm25, 1, 0
  %v113 = vsel %vm26, 1, 0
  %vm114 = vcmp.eq.s32.totalorder %v112, 1
  %vm115 = vcmp.eq.s32.totalorder %v113, 1
  %117 = vset.pattern.permute.xlu0 3
  %118 = vperm.xlu0 %117, %v99
  %v119 = vpop.permute.xlu0 %118
  %v121 = vsel %vm114, %v119, %v111
  %v122 = vsel %vm115, %v119, %v108
  %123 = vrot.lane.b32.xlu0 %v96, 127
  %v124 = vpop.permute.xlu0 %123
  %125 = vrot.lane.b32.xlu0 %v97, 127
  %v126 = vpop.permute.xlu0 %125
  %vm127 = vcmask 1039360
  %v128 = vsel %vm127, %v124, %v126
  %v132 = vsel %vm127, %v126, %v124
  %v133 = vsel %vm27, 1, 0
  %v134 = vsel %vm28, 1, 0
  %vm135 = vcmp.eq.s32.totalorder %v133, 1
  %vm136 = vcmp.eq.s32.totalorder %v134, 1
  %v137 = vsel %vm135, %v119, %v128
  %v138 = vsel %vm136, %v119, %v132
  %139 = vset.pattern.permute.xlu0 4
  %140 = vperm.xlu0 %139, %v29
  %v141 = vpop.permute.xlu0 %140
  %v143 = vmul.f32 %v141, %v121
  %v144 = vmul.f32 %v141, %v122
  %145 = vset.pattern.permute.xlu0 5
  %146 = vperm.xlu0 %145, %v29
  %v147 = vpop.permute.xlu0 %146
  %v149 = vmul.f32 %v147, %v96
  %v150 = vmul.f32 %v147, %v97
  %v151 = vadd.f32 %v143, %v149
  %v152 = vadd.f32 %v144, %v150
  %153 = vset.pattern.permute.xlu0 6
  %154 = vperm.xlu0 %153, %v29
  %v155 = vpop.permute.xlu0 %154
  %v157 = vmul.f32 %v155, %v137
  %v158 = vmul.f32 %v155, %v138
  %v159 = vadd.f32 %v151, %v157
  %v160 = vadd.f32 %v152, %v158
  %161 = vset.pattern.permute.xlu0 7
  %162 = vperm.xlu0 %161, %v29
  %v163 = vpop.permute.xlu0 %162
  %v165 = vadd.f32 %v159, %v163
  %v166 = vadd.f32 %v160, %v163
  %v167 = vmax.f32 %v165, 0.0
  %v168 = vmax.f32 %v166, 0.0
  %v169 = vmin.f32 %v167, 6.0
  %v170 = vmin.f32 %v168, 6.0
  %172 = vset.pattern.permute.xlu0 0
  %173 = vperm.xlu0 %172, %v30
  %v174 = vpop.permute.xlu0 %173
  %v176 = vlaneseq
  %v177 = vshrl.u32 %v176, 7
  %v178 = vsub.s32 0, %v177
  %v179 = vrot.slane %v169, %v178
  %v180 = vlaneseq
  %v181 = vshrl.u32 %v180, 7
  %v182 = vsub.s32 0, %v181
  %v183 = vrot.slane %v170, %v182
  %v184 = vmul.f32 %v174, %v179
  %v185 = vmul.f32 %v174, %v183
  %186 = vset.pattern.permute.xlu0 1
  %187 = vperm.xlu0 %186, %v30
  %v188 = vpop.permute.xlu0 %187
  %v190 = vlaneseq
  %v191 = vshrl.u32 %v190, 7
  %v192 = vsub.s32 1, %v191
  %v193 = vrot.slane %v169, %v192
  %v194 = vlaneseq
  %v195 = vshrl.u32 %v194, 7
  %v196 = vsub.s32 1, %v195
  %v197 = vrot.slane %v170, %v196
  %v198 = vmul.f32 %v188, %v193
  %v199 = vmul.f32 %v188, %v197
  %v200 = vadd.f32 %v184, %v198
  %v201 = vadd.f32 %v185, %v199
  %202 = vset.pattern.permute.xlu0 2
  %203 = vperm.xlu0 %202, %v30
  %v204 = vpop.permute.xlu0 %203
  %v206 = vlaneseq
  %v207 = vshrl.u32 %v206, 7
  %v208 = vsub.s32 2, %v207
  %v209 = vrot.slane %v169, %v208
  %v210 = vlaneseq
  %v211 = vshrl.u32 %v210, 7
  %v212 = vsub.s32 2, %v211
  %v213 = vrot.slane %v170, %v212
  %v214 = vmul.f32 %v204, %v209
  %v215 = vmul.f32 %v204, %v213
  %v216 = vadd.f32 %v200, %v214
  %v217 = vadd.f32 %v201, %v215
  %218 = vset.pattern.permute.xlu0 3
  %219 = vperm.xlu0 %218, %v30
  %v220 = vpop.permute.xlu0 %219
  %v222 = vlaneseq
  %v223 = vshrl.u32 %v222, 7
  %v224 = vsub.s32 3, %v223
  %v225 = vrot.slane %v169, %v224
  %v226 = vlaneseq
  %v227 = vshrl.u32 %v226, 7
  %v228 = vsub.s32 3, %v227
  %v229 = vrot.slane %v170, %v228
  %v230 = vmul.f32 %v220, %v225
  %v231 = vmul.f32 %v220, %v229
  %v232 = vadd.f32 %v216, %v230
  %v233 = vadd.f32 %v217, %v231
  %234 = vset.pattern.permute.xlu0 4
  %235 = vperm.xlu0 %234, %v30
  %v236 = vpop.permute.xlu0 %235
  %v238 = vadd.f32 %v232, %v236
  %v239 = vadd.f32 %v233, %v236
  %v240 = vlaneseq
  %v241 = vshrl.u32 %v240, 7
  %v242 = vsub.s32 4, %v241
  %v243 = vrot.slane %v169, %v242
  %v244 = vlaneseq
  %v245 = vshrl.u32 %v244, 7
  %v246 = vsub.s32 4, %v245
  %v247 = vrot.slane %v170, %v246
  %v248 = vmul.f32 %v174, %v243
  %v249 = vmul.f32 %v174, %v247
  %v250 = vlaneseq
  %v251 = vshrl.u32 %v250, 7
  %v252 = vsub.s32 5, %v251
  %v253 = vrot.slane %v169, %v252
  %v254 = vlaneseq
  %v255 = vshrl.u32 %v254, 7
  %v256 = vsub.s32 5, %v255
  %v257 = vrot.slane %v170, %v256
  %v258 = vmul.f32 %v188, %v253
  %v259 = vmul.f32 %v188, %v257
  %v260 = vadd.f32 %v248, %v258
  %v261 = vadd.f32 %v249, %v259
  %v262 = vlaneseq
  %v263 = vshrl.u32 %v262, 7
  %v264 = vsub.s32 6, %v263
  %v265 = vrot.slane %v169, %v264
  %v266 = vlaneseq
  %v267 = vshrl.u32 %v266, 7
  %v268 = vsub.s32 6, %v267
  %v269 = vrot.slane %v170, %v268
  %v270 = vmul.f32 %v204, %v265
  %v271 = vmul.f32 %v204, %v269
  %v272 = vadd.f32 %v260, %v270
  %v273 = vadd.f32 %v261, %v271
  %v274 = vlaneseq
  %v275 = vshrl.u32 %v274, 7
  %v276 = vsub.s32 7, %v275
  %v277 = vrot.slane %v169, %v276
  %v278 = vlaneseq
  %v279 = vshrl.u32 %v278, 7
  %v280 = vsub.s32 7, %v279
  %v281 = vrot.slane %v170, %v280
  %v282 = vmul.f32 %v220, %v277
  %v283 = vmul.f32 %v220, %v281
  %v284 = vadd.f32 %v272, %v282
  %v285 = vadd.f32 %v273, %v283
  %v286 = vadd.f32 %v284, %v236
  %v287 = vadd.f32 %v285, %v236
  %v290 = vrot.slane %v286, 4
  %v291 = vrot.slane %v287, 4
  %vm294 = vcmask 1043456
  %v295 = vsel %vm294, %v238, %v290
  %v296 = vsel %vm294, %v239, %v291
  %v297 = vadd.f32 %v14, %v295
  %v298 = vadd.f32 %v15, %v296
  %299 = vst [vmem:[%s3] sm:$0xff] %v297
  %300 = vst [vmem:[%s3 + $0x8] sm:$0xff] %v298
  // Predicated region
  $region14: #{_lambda_.1} parent=0 // pred_check
    _
  $region15: #{_lambda_.1} parent=0 // pred_check_branch
    %302 = sbr.rel (0) target = $region17
  $region16: #{_lambda_.1} parent=0 // pred_region
    _
  $region17: #{_lambda_.1} parent=0 // pred_fallthru
    _
  // Predicated region
  $region18: #{_lambda_.1} parent=0 // pred_check
    _
  $region19: #{_lambda_.1} parent=0 // pred_check_branch
    %304 = sbr.rel (0) target = $region21
  $region20: #{_lambda_.1} parent=0 // pred_region
    _
  $region21: #{_lambda_.1} parent=0 // pred_fallthru
    _

</llo_original>
